<compile_context>
chip_gen: v5e
topology: v5e:2x2
jax: 0.10.0
libtpu: 0.0.40
codegen_flags: <defaults>
</compile_context>

<pallas_src>
import jax
import jax.numpy as jnp
from jax import lax
from jax.experimental import pallas as pl
from jax.experimental.pallas import tpu as pltpu


IN_DIM, H1_DIM, H2_DIM, OUT_DIM = 4, 10, 20, 3
H1_PAD, H2_PAD = 16, 32   # padded hidden sizes (resident weights only)


def _round_up(n, m):
    return ((n + m - 1) // m) * m


def _mlp_kernel(x_ref, w1_ref, b1_ref, w2_ref, b2_ref, w3_ref, b3_ref, o_ref):
    x = x_ref[...]                                               # [TB, 4]

    # layer1: W1 [16,4] . x [TB,4], contracting dim 1 of both (NT matmul on
    # the MXU, no transpose needed) -> h1 [16, TB]; batch on lanes from here on.
    h1 = lax.dot_general(
        w1_ref[...], x,
        dimension_numbers=(((1,), (1,)), ((), ())),
        preferred_element_type=jnp.float32,
        precision=lax.Precision.HIGHEST) + b1_ref[...]
    h1 = jnp.maximum(h1, 0.0)                                    # [16, TB]

    # layer2: [32,16] @ [16,TB] + [32,1] -> ReLU
    h2 = jnp.dot(w2_ref[...], h1, preferred_element_type=jnp.float32,
                 precision=lax.Precision.HIGHEST) + b2_ref[...]
    h2 = jnp.maximum(h2, 0.0)                                    # [32, TB]

    # layer3: [3,32] @ [32,TB] + [3,1]  (no activation)
    out = jnp.dot(w3_ref[...], h2, preferred_element_type=jnp.float32,
                  precision=lax.Precision.HIGHEST) + b3_ref[...]

    o_ref[...] = out.astype(o_ref.dtype)                         # [3, TB]


def init_params(key):
    """PyTorch nn.Linear default init: U(-1/sqrt(fan_in), 1/sqrt(fan_in)).
    Weights in PyTorch layout [out, in]; biases [out]."""
    dims = [(IN_DIM, H1_DIM), (H1_DIM, H2_DIM), (H2_DIM, OUT_DIM)]
    params = {}
    keys = jax.random.split(key, 2 * len(dims))
    for i, (fan_in, fan_out) in enumerate(dims):
        bound = 1.0 / jnp.sqrt(float(fan_in))
        w = jax.random.uniform(keys[2 * i], (fan_out, fan_in),
                               minval=-bound, maxval=bound, dtype=jnp.float32)
        b = jax.random.uniform(keys[2 * i + 1], (fan_out,),
                               minval=-bound, maxval=bound, dtype=jnp.float32)
        params[f"w{i + 1}"] = w
        params[f"b{i + 1}"] = b
    return params


def prepare_params(params):
    """Zero-pad ONLY the tiny resident weights/biases (hidden dims to 16/32).
    Streamed tensors (input rows = 4, output rows = 3) are NOT padded.
    Zero padding is numerically exact (padded rows/cols contribute nothing)."""
    def pad_w(w, out_pad, in_pad):
        o, i = w.shape
        return jnp.zeros((out_pad, in_pad), jnp.float32).at[:o, :i].set(w)

    def pad_b(b, out_pad):
        o = b.shape[0]
        return jnp.zeros((out_pad, 1), jnp.float32).at[:o, 0].set(b)

    return {
        "w1": pad_w(params["w1"], H1_PAD, IN_DIM),   "b1": pad_b(params["b1"], H1_PAD),
        "w2": pad_w(params["w2"], H2_PAD, H1_PAD),   "b2": pad_b(params["b2"], H2_PAD),
        "w3": pad_w(params["w3"], OUT_DIM, H2_PAD),  "b3": pad_b(params["b3"], OUT_DIM),
    }


def load_iris_v1_forward(x, padded_params, *, batch_tile=8192):
    """x: [B, 4] float32 -> [B, 3] float32."""
    B = x.shape[0]
    x = x.astype(jnp.float32)

    # Batch tile on the lane axis: multiple of 128.  Big tiles amortize the
    # ~0.35 us per-grid-step overhead; cap at 16384 so the f32 intermediates
    # (h1 [16,TB], h2 [32,TB]) + double-buffered x/out tiles stay comfortably
    # inside v5e's 16 MiB scoped-VMEM default.
    tb_desired = min(_round_up(max(batch_tile, 128), 128), 16384)
    b_ceil = _round_up(max(B, 1), 128)
    if b_ceil >= 2 * 128:
        # Guarantee >= 2 grid steps: lets v7x's two TensorCores split the
        # "parallel" batch axis and gives the DMA pipeline overlap.
        TB = min(tb_desired, _round_up(pl.cdiv(b_ceil, 2), 128))
    else:
        TB = b_ceil
    B_pad = _round_up(B, TB)
    num_tiles = B_pad // TB

    # Cheap row-pad only when the batch is ragged vs. the tile (no transpose,
    # no lane padding).  Padded rows are independent columns downstream and
    # get sliced away.
    if B_pad != B:
        x_in = jnp.zeros((B_pad, IN_DIM), jnp.float32).at[:B].set(x)
    else:
        x_in = x

    # Weights/biases are tiny -> fully VMEM-resident (same block every step).
    resident = lambda shape: pl.BlockSpec(shape, lambda i: (0, 0))

    out_t = pl.pallas_call(
        _mlp_kernel,
        out_shape=jax.ShapeDtypeStruct((OUT_DIM, B_pad), jnp.float32),
        grid=(num_tiles,),
        in_specs=[
            pl.BlockSpec((TB, IN_DIM), lambda i: (i, 0)),   # stream x tiles
            resident((H1_PAD, IN_DIM)),  resident((H1_PAD, 1)),
            resident((H2_PAD, H1_PAD)),  resident((H2_PAD, 1)),
            resident((OUT_DIM, H2_PAD)), resident((OUT_DIM, 1)),
        ],
        out_specs=pl.BlockSpec((OUT_DIM, TB), lambda i: (0, i)),
        compiler_params=pltpu.CompilerParams(
            dimension_semantics=("parallel",)),  # v7x: shard batch over 2 TCs
    )(x_in,
      padded_params["w1"], padded_params["b1"],
      padded_params["w2"], padded_params["b2"],
      padded_params["w3"], padded_params["b3"])

    # Output is kept lane-dense / transposed inside the kernel; one small
    # transpose back to the caller's [B, 3] layout on the host side.
    return out_t[:, :B].T


def reference_forward(x, params):
    h1 = jnp.maximum(x @ params["w1"].T + params["b1"], 0.0)
    h2 = jnp.maximum(h1 @ params["w2"].T + params["b2"], 0.0)
    return h2 @ params["w3"].T + params["b3"]


if __name__ == "__main__":
    key = jax.random.PRNGKey(0)
    pkey, xkey1, xkey2 = jax.random.split(key, 3)

    params = init_params(pkey)
    padded = prepare_params(params)

    # Small Iris-like batch: B=8, features=4 (single tile).
    x_small = jax.random.normal(xkey1, (8, IN_DIM), dtype=jnp.float32)
    out_small = jax.block_until_ready(load_iris_v1_forward(x_small, padded))
    ref_small = reference_forward(x_small, params)
    assert out_small.shape == (8, OUT_DIM)
    assert jnp.allclose(out_small, ref_small, atol=1e-5, rtol=1e-5)

    # Multi-tile + ragged-batch path (B not a multiple of TB).
    x_big = jax.random.normal(xkey2, (1000, IN_DIM), dtype=jnp.float32)
    out_big = jax.block_until_ready(
        load_iris_v1_forward(x_big, padded, batch_tile=256))
    ref_big = reference_forward(x_big, params)
    assert out_big.shape == (1000, OUT_DIM)
    assert jnp.allclose(out_big, ref_big, atol=1e-5, rtol=1e-5)

    print("KERNEL_OK")
</pallas_src>

<mosaic_0001>
module attributes {stable_mosaic.version = 11 : i64} {
  func.func @_mlp_kernel(%arg0: i32, %arg1: memref<128x4xf32, #tpu.memory_space<vmem>>, %arg2: memref<16x4xf32, #tpu.memory_space<vmem>>, %arg3: memref<16x1xf32, #tpu.memory_space<vmem>>, %arg4: memref<32x16xf32, #tpu.memory_space<vmem>>, %arg5: memref<32x1xf32, #tpu.memory_space<vmem>>, %arg6: memref<3x32xf32, #tpu.memory_space<vmem>>, %arg7: memref<3x1xf32, #tpu.memory_space<vmem>>, %arg8: memref<3x128xf32, #tpu.memory_space<vmem>>) attributes {dimension_semantics = [#tpu.dimension_semantics<parallel>], iteration_bounds = array<i64: 1>, scalar_prefetch = 0 : i64, scratch_operands = 0 : i64, tpu.core_type = #tpu.core_type<tc>, window_params = [{transform_indices = @transform_0, window_bounds = array<i64: 128, 4>}, {pipeline_mode = #tpu.pipeline_mode<synchronous>, transform_indices = @transform_1, window_bounds = array<i64: 16, 4>}, {pipeline_mode = #tpu.pipeline_mode<synchronous>, transform_indices = @transform_2, window_bounds = array<i64: 16, 1>}, {pipeline_mode = #tpu.pipeline_mode<synchronous>, transform_indices = @transform_3, window_bounds = array<i64: 32, 16>}, {pipeline_mode = #tpu.pipeline_mode<synchronous>, transform_indices = @transform_4, window_bounds = array<i64: 32, 1>}, {pipeline_mode = #tpu.pipeline_mode<synchronous>, transform_indices = @transform_5, window_bounds = array<i64: 3, 32>}, {pipeline_mode = #tpu.pipeline_mode<synchronous>, transform_indices = @transform_6, window_bounds = array<i64: 3, 1>}, {transform_indices = @transform_7, window_bounds = array<i64: 3, 128>}]} {
    %c0 = arith.constant 0 : index
    %c0_0 = arith.constant 0 : index
    %0 = vector.load %arg1[%c0, %c0_0] : memref<128x4xf32, #tpu.memory_space<vmem>>, vector<128x4xf32>
    %c0_1 = arith.constant 0 : index
    %c0_2 = arith.constant 0 : index
    %1 = vector.load %arg2[%c0_1, %c0_2] : memref<16x4xf32, #tpu.memory_space<vmem>>, vector<16x4xf32>
    %cst = arith.constant dense<0.000000e+00> : vector<16x128xf32>
    %2 = tpu.matmul %1, %0, %cst {dimension_numbers = #tpu.dot_dimension_numbers<[1], [1], [0], [0], [0, 0, 1, 0], [], []>, precision = #tpu.contract_precision<fp32>} : vector<16x4xf32>, vector<128x4xf32>, vector<16x128xf32> -> vector<16x128xf32>
    %c0_3 = arith.constant 0 : index
    %c0_4 = arith.constant 0 : index
    %3 = vector.load %arg3[%c0_3, %c0_4] : memref<16x1xf32, #tpu.memory_space<vmem>>, vector<16x1xf32>
    %4 = vector.broadcast %3 : vector<16x1xf32> to vector<16x128xf32>
    %5 = arith.addf %2, %4 : vector<16x128xf32>
    %cst_5 = arith.constant 0.000000e+00 : f32
    %6 = vector.broadcast %cst_5 : f32 to vector<16x128xf32>
    %7 = arith.maximumf %5, %6 : vector<16x128xf32>
    %c0_6 = arith.constant 0 : index
    %c0_7 = arith.constant 0 : index
    %8 = vector.load %arg4[%c0_6, %c0_7] : memref<32x16xf32, #tpu.memory_space<vmem>>, vector<32x16xf32>
    %cst_8 = arith.constant dense<0.000000e+00> : vector<32x128xf32>
    %9 = tpu.matmul %8, %7, %cst_8 {dimension_numbers = #tpu.dot_dimension_numbers<[1], [0], [0], [1], [0, 0, 1, 1], [], []>, precision = #tpu.contract_precision<fp32>} : vector<32x16xf32>, vector<16x128xf32>, vector<32x128xf32> -> vector<32x128xf32>
    %c0_9 = arith.constant 0 : index
    %c0_10 = arith.constant 0 : index
    %10 = vector.load %arg5[%c0_9, %c0_10] : memref<32x1xf32, #tpu.memory_space<vmem>>, vector<32x1xf32>
    %11 = vector.broadcast %10 : vector<32x1xf32> to vector<32x128xf32>
    %12 = arith.addf %9, %11 : vector<32x128xf32>
    %cst_11 = arith.constant 0.000000e+00 : f32
    %13 = vector.broadcast %cst_11 : f32 to vector<32x128xf32>
    %14 = arith.maximumf %12, %13 : vector<32x128xf32>
    %c0_12 = arith.constant 0 : index
    %c0_13 = arith.constant 0 : index
    %15 = vector.load %arg6[%c0_12, %c0_13] : memref<3x32xf32, #tpu.memory_space<vmem>>, vector<3x32xf32>
    %cst_14 = arith.constant dense<0.000000e+00> : vector<3x128xf32>
    %16 = tpu.matmul %15, %14, %cst_14 {dimension_numbers = #tpu.dot_dimension_numbers<[1], [0], [0], [1], [0, 0, 1, 1], [], []>, precision = #tpu.contract_precision<fp32>} : vector<3x32xf32>, vector<32x128xf32>, vector<3x128xf32> -> vector<3x128xf32>
    %c0_15 = arith.constant 0 : index
    %c0_16 = arith.constant 0 : index
    %17 = vector.load %arg7[%c0_15, %c0_16] : memref<3x1xf32, #tpu.memory_space<vmem>>, vector<3x1xf32>
    %18 = vector.broadcast %17 : vector<3x1xf32> to vector<3x128xf32>
    %19 = arith.addf %16, %18 : vector<3x128xf32>
    %c0_17 = arith.constant 0 : index
    %c0_18 = arith.constant 0 : index
    %20 = vector.load %arg8[%c0_17, %c0_18] : memref<3x128xf32, #tpu.memory_space<vmem>>, vector<3x128xf32>
    tpu.vector_store %arg8[%c0_17, %c0_18], %19 {strides = array<i32>} : memref<3x128xf32, #tpu.memory_space<vmem>>, vector<3x128xf32>,
    return
  }
  func.func @transform_0(%arg0: i32) -> (i32, i32) {
    %c0_i32 = arith.constant 0 : i32
    %c0_i32_0 = arith.constant 0 : i32
    return %arg0, %c0_i32 : i32, i32
  }
  func.func @transform_1(%arg0: i32) -> (i32, i32) {
    %c0_i32 = arith.constant 0 : i32
    %c0_i32_0 = arith.constant 0 : i32
    %c0_i32_1 = arith.constant 0 : i32
    return %c0_i32, %c0_i32_0 : i32, i32
  }
  func.func @transform_2(%arg0: i32) -> (i32, i32) {
    %c0_i32 = arith.constant 0 : i32
    %c0_i32_0 = arith.constant 0 : i32
    %c0_i32_1 = arith.constant 0 : i32
    return %c0_i32, %c0_i32_0 : i32, i32
  }
  func.func @transform_3(%arg0: i32) -> (i32, i32) {
    %c0_i32 = arith.constant 0 : i32
    %c0_i32_0 = arith.constant 0 : i32
    %c0_i32_1 = arith.constant 0 : i32
    return %c0_i32, %c0_i32_0 : i32, i32
  }
  func.func @transform_4(%arg0: i32) -> (i32, i32) {
    %c0_i32 = arith.constant 0 : i32
    %c0_i32_0 = arith.constant 0 : i32
    %c0_i32_1 = arith.constant 0 : i32
    return %c0_i32, %c0_i32_0 : i32, i32
  }
  func.func @transform_5(%arg0: i32) -> (i32, i32) {
    %c0_i32 = arith.constant 0 : i32
    %c0_i32_0 = arith.constant 0 : i32
    %c0_i32_1 = arith.constant 0 : i32
    return %c0_i32, %c0_i32_0 : i32, i32
  }
  func.func @transform_6(%arg0: i32) -> (i32, i32) {
    %c0_i32 = arith.constant 0 : i32
    %c0_i32_0 = arith.constant 0 : i32
    %c0_i32_1 = arith.constant 0 : i32
    return %c0_i32, %c0_i32_0 : i32, i32
  }
  func.func @transform_7(%arg0: i32) -> (i32, i32) {
    %c0_i32 = arith.constant 0 : i32
    %c0_i32_0 = arith.constant 0 : i32
    return %c0_i32, %arg0 : i32, i32
  }
}

</mosaic_0001>

<llo_original>
// kernel: tpu_custom_call.1
$region0: #{tpu_custom_call.1}
  #allocation0 [shape = 'u32[]', space=smem, size = 0x4, offset = 0x4, fixed_abs, tag = 'smem constant byte address 0x4 - core index']
  #allocation1 [shape = 'u32[72,128]{1,0:T(1,128)}', space=vmem, size = 0x9000, scoped, tag = 'internal scratch']
  %s0 = inlined_call_operand.vmem [shape: f32[128,4], index: 0, kind: input, shape index: {}]
  %s1 = inlined_call_operand.vmem [shape: f32[16,4], index: 1, kind: input, shape index: {}]
  %s2 = inlined_call_operand.vmem [shape: f32[16,1], index: 2, kind: input, shape index: {}]
  %s3 = inlined_call_operand.vmem [shape: f32[32,16], index: 3, kind: input, shape index: {}]
  %s4 = inlined_call_operand.vmem [shape: f32[32,1], index: 4, kind: input, shape index: {}]
  %s5 = inlined_call_operand.vmem [shape: f32[3,32], index: 5, kind: input, shape index: {}]
  %s6 = inlined_call_operand.vmem [shape: f32[3,1], index: 6, kind: input, shape index: {}]
  %s7 = inlined_call_operand.hbm [shape: f32[3,128], index: 7, kind: output, shape index: {}]
  %s8 = sld [smem:[#allocation0]]
  $region38: #{tpu_custom_call.1} parent=0
    _
  %s10 = ssub.s32 1, %s8
  %s11 = scalar_select 0, %s10, %s8
  $region1: #{tpu_custom_call.1} parent=0
    #allocation2 [shape = 'u8[2048]{0}', space=vmem, size = 0x800, scoped, tag = 'output window, operand 0, single buffered']
    #allocation3 [shape = 's32[1]{0}', space=sflag, size = 0x4, scoped, tag = 'scoped memory for tpu_custom_call.1']
    %12 = vsyncpa [#allocation3], 0
    // Predicated region
    $region2: #{tpu_custom_call.1} parent=1 // pred_check
      _
    $region3: #{tpu_custom_call.1} parent=1 // pred_check_branch
      %14 = sbr.rel (0) target = $region5
    $region4: #{tpu_custom_call.1} parent=1 // pred_region
      _
    $region5: #{tpu_custom_call.1} parent=1 // pred_fallthru
      _
    // Predicated region
    $region6: #{tpu_custom_call.1} parent=1 // pred_check
      _
    $region7: #{tpu_custom_call.1} parent=1 // pred_check_branch
      %16 = sbr.rel (0) target = $region9
    $region8: #{tpu_custom_call.1} parent=1 // pred_region
      _
    $region9: #{tpu_custom_call.1} parent=1 // pred_fallthru
      _
    // Predicated region
    $region10: #{tpu_custom_call.1} parent=1 // pred_check
      _
    $region11: #{tpu_custom_call.1} parent=1 // pred_check_branch
      %18 = sbr.rel (0) target = $region13
    $region12: #{tpu_custom_call.1} parent=1 // pred_region
      _
    $region13: #{tpu_custom_call.1} parent=1 // pred_fallthru
      _
    // Predicated region
    $region14: #{tpu_custom_call.1} parent=1 // pred_check
      _
    $region15: #{tpu_custom_call.1} parent=1 // pred_check_branch
      %20 = sbr.rel (0) target = $region17
    $region16: #{tpu_custom_call.1} parent=1 // pred_region
      _
    $region17: #{tpu_custom_call.1} parent=1 // pred_fallthru
      _
    // Predicated region
    $region18: #{tpu_custom_call.1} parent=1 // pred_check
      _
    $region19: #{tpu_custom_call.1} parent=1 // pred_check_branch
      %22 = sbr.rel (0) target = $region21
    $region20: #{tpu_custom_call.1} parent=1 // pred_region
      _
    $region21: #{tpu_custom_call.1} parent=1 // pred_fallthru
      _
    // Predicated region
    $region22: #{tpu_custom_call.1} parent=1 // pred_check
      _
    $region23: #{tpu_custom_call.1} parent=1 // pred_check_branch
      %24 = sbr.rel (0) target = $region25
    $region24: #{tpu_custom_call.1} parent=1 // pred_region
      _
    $region25: #{tpu_custom_call.1} parent=1 // pred_fallthru
      _
    // Predicated region
    $region26: #{tpu_custom_call.1} parent=1 // pred_check
      _
    $region27: #{tpu_custom_call.1} parent=1 // pred_check_branch
      %26 = sbr.rel (0) target = $region29
    $region28: #{tpu_custom_call.1} parent=1 // pred_region
      _
    $region29: #{tpu_custom_call.1} parent=1 // pred_fallthru
      _
    %v27 = vld [vmem:[%s0] sm:$0xff]
    %v28 = vld [vmem:[%s0 + $0x8] sm:$0xff]
    %v29 = vld [vmem:[%s0 + $0x10] sm:$0xff]
    %v30 = vld [vmem:[%s0 + $0x18] sm:$0xff]
    %v31 = vld [vmem:[%s0 + $0x20] sm:$0xff]
    %v32 = vld [vmem:[%s0 + $0x28] sm:$0xff]
    %v33 = vld [vmem:[%s0 + $0x30] sm:$0xff]
    %v34 = vld [vmem:[%s0 + $0x38] sm:$0xff]
    %v35 = vld [vmem:[%s0 + $0x40] sm:$0xff]
    %v36 = vld [vmem:[%s0 + $0x48] sm:$0xff]
    %v37 = vld [vmem:[%s0 + $0x50] sm:$0xff]
    %v38 = vld [vmem:[%s0 + $0x58] sm:$0xff]
    %v39 = vld [vmem:[%s0 + $0x60] sm:$0xff]
    %v40 = vld [vmem:[%s0 + $0x68] sm:$0xff]
    %v41 = vld [vmem:[%s0 + $0x70] sm:$0xff]
    %v42 = vld [vmem:[%s0 + $0x78] sm:$0xff]
    %v43 = vld [vmem:[%s1] sm:$0xff]
    %v44 = vld [vmem:[%s1 + $0x8] sm:$0xff]
    %v45 = vld [vmem:[%s2] sm:$0xff]
    %v46 = vld [vmem:[%s2 + $0x8] sm:$0xff]
    %48 = vset.pattern.permute.xlu0 0
    %49 = vperm.xlu0 %48, %v45
    %v50 = vpop.permute.xlu0 %49
    %53 = vset.pattern.permute.xlu0 0
    %54 = vperm.xlu0 %53, %v46
    %v55 = vpop.permute.xlu0 %54
    %vm57 = vcmask 31744
    %v59 = vsel %vm57, %v43, 0
    %v62 = vsel %vm57, %v44, 0
    %v65 = vsel %vm57, %v27, 0
    %v68 = vsel %vm57, %v28, 0
    %v71 = vsel %vm57, %v29, 0
    %v74 = vsel %vm57, %v30, 0
    %v77 = vsel %vm57, %v31, 0
    %v80 = vsel %vm57, %v32, 0
    %v83 = vsel %vm57, %v33, 0
    %v86 = vsel %vm57, %v34, 0
    %v89 = vsel %vm57, %v35, 0
    %v92 = vsel %vm57, %v36, 0
    %v95 = vsel %vm57, %v37, 0
    %v98 = vsel %vm57, %v38, 0
    %v101 = vsel %vm57, %v39, 0
    %v104 = vsel %vm57, %v40, 0
    %v107 = vsel %vm57, %v41, 0
    %v110 = vsel %vm57, %v42, 0
    %v112 = vand.u32 %v110, 4294901760
    %113 = vmatpush.xpose.msra.mxu0 %v112
    %v114 = vand.u32 %v107, 4294901760
    %115 = vmatpush.xpose.msra.mxu0 %v114
    %v116 = vand.u32 %v104, 4294901760
    %117 = vmatpush.xpose.msra.mxu0 %v116
    %v118 = vand.u32 %v101, 4294901760
    %119 = vmatpush.xpose.msra.mxu0 %v118
    %v120 = vand.u32 %v98, 4294901760
    %121 = vmatpush.xpose.msra.mxu0 %v120
    %v122 = vand.u32 %v95, 4294901760
    %123 = vmatpush.xpose.msra.mxu0 %v122
    %v124 = vand.u32 %v92, 4294901760
    %125 = vmatpush.xpose.msra.mxu0 %v124
    %v126 = vand.u32 %v89, 4294901760
    %127 = vmatpush.xpose.msra.mxu0 %v126
    %v128 = vand.u32 %v86, 4294901760
    %129 = vmatpush.xpose.msra.mxu0 %v128
    %v130 = vand.u32 %v83, 4294901760
    %131 = vmatpush.xpose.msra.mxu0 %v130
    %v132 = vand.u32 %v80, 4294901760
    %133 = vmatpush.xpose.msra.mxu0 %v132
    %v134 = vand.u32 %v77, 4294901760
    %135 = vmatpush.xpose.msra.mxu0 %v134
    %v136 = vand.u32 %v74, 4294901760
    %137 = vmatpush.xpose.msra.mxu0 %v136
    %v138 = vand.u32 %v71, 4294901760
    %139 = vmatpush.xpose.msra.mxu0 %v138
    %v140 = vand.u32 %v68, 4294901760
    %141 = vmatpush.xpose.msra.mxu0 %v140
    %v142 = vand.u32 %v65, 4294901760
    %143 = vmatpush.xpose.msra.mxu0 %v142
    %v144 = vand.u32 %v59, 4294901760
    %v145 = vsub.f32 %v59, %v144
    %v146 = vand.u32 %v145, 4294901760
    %v147 = vsub.f32 %v145, %v146
    %v148 = vand.u32 %v147, 4294901760
    %149 = vmatmul.f32.gmra.mxu0 %v148
    %v150 = vpop.f32.mrf.mxu0
    %v151 = vadd.f32 %v50, %v150
    %v152 = vand.u32 %v62, 4294901760
    %v153 = vsub.f32 %v62, %v152
    %v154 = vand.u32 %v153, 4294901760
    %v155 = vsub.f32 %v153, %v154
    %v156 = vand.u32 %v155, 4294901760
    %157 = vmatmul.f32.gmra.mxu0 %v156
    %v158 = vpop.f32.mrf.mxu0
    %v159 = vadd.f32 %v55, %v158
    %160 = vdwg.mxu0
    %v161 = vand.u32 %v110, 4294901760
    %v162 = vsub.f32 %v110, %v161
    %v163 = vand.u32 %v162, 4294901760
    %v164 = vsub.f32 %v162, %v163
    %v165 = vand.u32 %v164, 4294901760
    %166 = vmatpush.xpose.msra.mxu0 %v165
    %v167 = vand.u32 %v107, 4294901760
    %v168 = vsub.f32 %v107, %v167
    %v169 = vand.u32 %v168, 4294901760
    %v170 = vsub.f32 %v168, %v169
    %v171 = vand.u32 %v170, 4294901760
    %172 = vmatpush.xpose.msra.mxu0 %v171
    %v173 = vand.u32 %v104, 4294901760
    %v174 = vsub.f32 %v104, %v173
    %v175 = vand.u32 %v174, 4294901760
    %v176 = vsub.f32 %v174, %v175
    %v177 = vand.u32 %v176, 4294901760
    %178 = vmatpush.xpose.msra.mxu0 %v177
    %v179 = vand.u32 %v101, 4294901760
    %v180 = vsub.f32 %v101, %v179
    %v181 = vand.u32 %v180, 4294901760
    %v182 = vsub.f32 %v180, %v181
    %v183 = vand.u32 %v182, 4294901760
    %184 = vmatpush.xpose.msra.mxu0 %v183
    %v185 = vand.u32 %v98, 4294901760
    %v186 = vsub.f32 %v98, %v185
    %v187 = vand.u32 %v186, 4294901760
    %v188 = vsub.f32 %v186, %v187
    %v189 = vand.u32 %v188, 4294901760
    %190 = vmatpush.xpose.msra.mxu0 %v189
    %v191 = vand.u32 %v95, 4294901760
    %v192 = vsub.f32 %v95, %v191
    %v193 = vand.u32 %v192, 4294901760
    %v194 = vsub.f32 %v192, %v193
    %v195 = vand.u32 %v194, 4294901760
    %196 = vmatpush.xpose.msra.mxu0 %v195
    %v197 = vand.u32 %v92, 4294901760
    %v198 = vsub.f32 %v92, %v197
    %v199 = vand.u32 %v198, 4294901760
    %v200 = vsub.f32 %v198, %v199
    %v201 = vand.u32 %v200, 4294901760
    %202 = vmatpush.xpose.msra.mxu0 %v201
    %v203 = vand.u32 %v89, 4294901760
    %v204 = vsub.f32 %v89, %v203
    %v205 = vand.u32 %v204, 4294901760
    %v206 = vsub.f32 %v204, %v205
    %v207 = vand.u32 %v206, 4294901760
    %208 = vmatpush.xpose.msra.mxu0 %v207
    %v209 = vand.u32 %v86, 4294901760
    %v210 = vsub.f32 %v86, %v209
    %v211 = vand.u32 %v210, 4294901760
    %v212 = vsub.f32 %v210, %v211
    %v213 = vand.u32 %v212, 4294901760
    %214 = vmatpush.xpose.msra.mxu0 %v213
    %v215 = vand.u32 %v83, 4294901760
    %v216 = vsub.f32 %v83, %v215
    %v217 = vand.u32 %v216, 4294901760
    %v218 = vsub.f32 %v216, %v217
    %v219 = vand.u32 %v218, 4294901760
    %220 = vmatpush.xpose.msra.mxu0 %v219
    %v221 = vand.u32 %v80, 4294901760
    %v222 = vsub.f32 %v80, %v221
    %v223 = vand.u32 %v222, 4294901760
    %v224 = vsub.f32 %v222, %v223
    %v225 = vand.u32 %v224, 4294901760
    %226 = vmatpush.xpose.msra.mxu0 %v225
    %v227 = vand.u32 %v77, 4294901760
    %v228 = vsub.f32 %v77, %v227
    %v229 = vand.u32 %v228, 4294901760
    %v230 = vsub.f32 %v228, %v229
    %v231 = vand.u32 %v230, 4294901760
    %232 = vmatpush.xpose.msra.mxu0 %v231
    %v233 = vand.u32 %v74, 4294901760
    %v234 = vsub.f32 %v74, %v233
    %v235 = vand.u32 %v234, 4294901760
    %v236 = vsub.f32 %v234, %v235
    %v237 = vand.u32 %v236, 4294901760
    %238 = vmatpush.xpose.msra.mxu0 %v237
    %v239 = vand.u32 %v71, 4294901760
    %v240 = vsub.f32 %v71, %v239
    %v241 = vand.u32 %v240, 4294901760
    %v242 = vsub.f32 %v240, %v241
    %v243 = vand.u32 %v242, 4294901760
    %244 = vmatpush.xpose.msra.mxu0 %v243
    %v245 = vand.u32 %v68, 4294901760
    %v246 = vsub.f32 %v68, %v245
    %v247 = vand.u32 %v246, 4294901760
    %v248 = vsub.f32 %v246, %v247
    %v249 = vand.u32 %v248, 4294901760
    %250 = vmatpush.xpose.msra.mxu0 %v249
    %v251 = vand.u32 %v65, 4294901760
    %v252 = vsub.f32 %v65, %v251
    %v253 = vand.u32 %v252, 4294901760
    %v254 = vsub.f32 %v252, %v253
    %v255 = vand.u32 %v254, 4294901760
    %256 = vmatpush.xpose.msra.mxu0 %v255
    %v257 = vand.u32 %v59, 4294901760
    %258 = vmatmul.f32.gmra.mxu0 %v257
    %v259 = vpop.f32.mrf.mxu0
    %v260 = vadd.f32 %v151, %v259
    %v261 = vand.u32 %v62, 4294901760
    %262 = vmatmul.f32.gmra.mxu0 %v261
    %v263 = vpop.f32.mrf.mxu0
    %v264 = vadd.f32 %v159, %v263
    %265 = vdwg.mxu0
    %v266 = vand.u32 %v110, 4294901760
    %v267 = vsub.f32 %v110, %v266
    %268 = vmatpush.xpose.msra.mxu0 %v267
    %v269 = vand.u32 %v107, 4294901760
    %v270 = vsub.f32 %v107, %v269
    %271 = vmatpush.xpose.msra.mxu0 %v270
    %v272 = vand.u32 %v104, 4294901760
    %v273 = vsub.f32 %v104, %v272
    %274 = vmatpush.xpose.msra.mxu0 %v273
    %v275 = vand.u32 %v101, 4294901760
    %v276 = vsub.f32 %v101, %v275
    %277 = vmatpush.xpose.msra.mxu0 %v276
    %v278 = vand.u32 %v98, 4294901760
    %v279 = vsub.f32 %v98, %v278
    %280 = vmatpush.xpose.msra.mxu0 %v279
    %v281 = vand.u32 %v95, 4294901760
    %v282 = vsub.f32 %v95, %v281
    %283 = vmatpush.xpose.msra.mxu0 %v282
    %v284 = vand.u32 %v92, 4294901760
    %v285 = vsub.f32 %v92, %v284
    %286 = vmatpush.xpose.msra.mxu0 %v285
    %v287 = vand.u32 %v89, 4294901760
    %v288 = vsub.f32 %v89, %v287
    %289 = vmatpush.xpose.msra.mxu0 %v288
    %v290 = vand.u32 %v86, 4294901760
    %v291 = vsub.f32 %v86, %v290
    %292 = vmatpush.xpose.msra.mxu0 %v291
    %v293 = vand.u32 %v83, 4294901760
    %v294 = vsub.f32 %v83, %v293
    %295 = vmatpush.xpose.msra.mxu0 %v294
    %v296 = vand.u32 %v80, 4294901760
    %v297 = vsub.f32 %v80, %v296
    %298 = vmatpush.xpose.msra.mxu0 %v297
    %v299 = vand.u32 %v77, 4294901760
    %v300 = vsub.f32 %v77, %v299
    %301 = vmatpush.xpose.msra.mxu0 %v300
    %v302 = vand.u32 %v74, 4294901760
    %v303 = vsub.f32 %v74, %v302
    %304 = vmatpush.xpose.msra.mxu0 %v303
    %v305 = vand.u32 %v71, 4294901760
    %v306 = vsub.f32 %v71, %v305
    %307 = vmatpush.xpose.msra.mxu0 %v306
    %v308 = vand.u32 %v68, 4294901760
    %v309 = vsub.f32 %v68, %v308
    %310 = vmatpush.xpose.msra.mxu0 %v309
    %v311 = vand.u32 %v65, 4294901760
    %v312 = vsub.f32 %v65, %v311
    %313 = vmatpush.xpose.msra.mxu0 %v312
    %v314 = vand.u32 %v59, 4294901760
    %v315 = vsub.f32 %v59, %v314
    %316 = vmatmul.f32.gmra.mxu0 %v315
    %v317 = vpop.f32.mrf.mxu0
    %v318 = vadd.f32 %v260, %v317
    %v319 = vand.u32 %v62, 4294901760
    %v320 = vsub.f32 %v62, %v319
    %321 = vmatmul.f32.gmra.mxu0 %v320
    %v322 = vpop.f32.mrf.mxu0
    %v323 = vadd.f32 %v264, %v322
    %324 = vdwg.mxu0
    %v325 = vand.u32 %v110, 4294901760
    %326 = vmatpush.xpose.msra.mxu0 %v325
    %v327 = vand.u32 %v107, 4294901760
    %328 = vmatpush.xpose.msra.mxu0 %v327
    %v329 = vand.u32 %v104, 4294901760
    %330 = vmatpush.xpose.msra.mxu0 %v329
    %v331 = vand.u32 %v101, 4294901760
    %332 = vmatpush.xpose.msra.mxu0 %v331
    %v333 = vand.u32 %v98, 4294901760
    %334 = vmatpush.xpose.msra.mxu0 %v333
    %v335 = vand.u32 %v95, 4294901760
    %336 = vmatpush.xpose.msra.mxu0 %v335
    %v337 = vand.u32 %v92, 4294901760
    %338 = vmatpush.xpose.msra.mxu0 %v337
    %v339 = vand.u32 %v89, 4294901760
    %340 = vmatpush.xpose.msra.mxu0 %v339
    %v341 = vand.u32 %v86, 4294901760
    %342 = vmatpush.xpose.msra.mxu0 %v341
    %v343 = vand.u32 %v83, 4294901760
    %344 = vmatpush.xpose.msra.mxu0 %v343
    %v345 = vand.u32 %v80, 4294901760
    %346 = vmatpush.xpose.msra.mxu0 %v345
    %v347 = vand.u32 %v77, 4294901760
    %348 = vmatpush.xpose.msra.mxu0 %v347
    %v349 = vand.u32 %v74, 4294901760
    %350 = vmatpush.xpose.msra.mxu0 %v349
    %v351 = vand.u32 %v71, 4294901760
    %352 = vmatpush.xpose.msra.mxu0 %v351
    %v353 = vand.u32 %v68, 4294901760
    %354 = vmatpush.xpose.msra.mxu0 %v353
    %v355 = vand.u32 %v65, 4294901760
    %356 = vmatpush.xpose.msra.mxu0 %v355
    %v357 = vand.u32 %v59, 4294901760
    %v358 = vsub.f32 %v59, %v357
    %v359 = vand.u32 %v358, 4294901760
    %360 = vmatmul.f32.gmra.mxu0 %v359
    %v361 = vpop.f32.mrf.mxu0
    %v362 = vadd.f32 %v318, %v361
    %v363 = vand.u32 %v62, 4294901760
    %v364 = vsub.f32 %v62, %v363
    %v365 = vand.u32 %v364, 4294901760
    %366 = vmatmul.f32.gmra.mxu0 %v365
    %v367 = vpop.f32.mrf.mxu0
    %v368 = vadd.f32 %v323, %v367
    %369 = vdwg.mxu0
    %v370 = vand.u32 %v110, 4294901760
    %v371 = vsub.f32 %v110, %v370
    %v372 = vand.u32 %v371, 4294901760
    %373 = vmatpush.xpose.msra.mxu0 %v372
    %v374 = vand.u32 %v107, 4294901760
    %v375 = vsub.f32 %v107, %v374
    %v376 = vand.u32 %v375, 4294901760
    %377 = vmatpush.xpose.msra.mxu0 %v376
    %v378 = vand.u32 %v104, 4294901760
    %v379 = vsub.f32 %v104, %v378
    %v380 = vand.u32 %v379, 4294901760
    %381 = vmatpush.xpose.msra.mxu0 %v380
    %v382 = vand.u32 %v101, 4294901760
    %v383 = vsub.f32 %v101, %v382
    %v384 = vand.u32 %v383, 4294901760
    %385 = vmatpush.xpose.msra.mxu0 %v384
    %v386 = vand.u32 %v98, 4294901760
    %v387 = vsub.f32 %v98, %v386
    %v388 = vand.u32 %v387, 4294901760
    %389 = vmatpush.xpose.msra.mxu0 %v388
    %v390 = vand.u32 %v95, 4294901760
    %v391 = vsub.f32 %v95, %v390
    %v392 = vand.u32 %v391, 4294901760
    %393 = vmatpush.xpose.msra.mxu0 %v392
    %v394 = vand.u32 %v92, 4294901760
    %v395 = vsub.f32 %v92, %v394
    %v396 = vand.u32 %v395, 4294901760
    %397 = vmatpush.xpose.msra.mxu0 %v396
    %v398 = vand.u32 %v89, 4294901760
    %v399 = vsub.f32 %v89, %v398
    %v400 = vand.u32 %v399, 4294901760
    %401 = vmatpush.xpose.msra.mxu0 %v400
    %v402 = vand.u32 %v86, 4294901760
    %v403 = vsub.f32 %v86, %v402
    %v404 = vand.u32 %v403, 4294901760
    %405 = vmatpush.xpose.msra.mxu0 %v404
    %v406 = vand.u32 %v83, 4294901760
    %v407 = vsub.f32 %v83, %v406
    %v408 = vand.u32 %v407, 4294901760
    %409 = vmatpush.xpose.msra.mxu0 %v408
    %v410 = vand.u32 %v80, 4294901760
    %v411 = vsub.f32 %v80, %v410
    %v412 = vand.u32 %v411, 4294901760
    %413 = vmatpush.xpose.msra.mxu0 %v412
    %v414 = vand.u32 %v77, 4294901760
    %v415 = vsub.f32 %v77, %v414
    %v416 = vand.u32 %v415, 4294901760
    %417 = vmatpush.xpose.msra.mxu0 %v416
    %v418 = vand.u32 %v74, 4294901760
    %v419 = vsub.f32 %v74, %v418
    %v420 = vand.u32 %v419, 4294901760
    %421 = vmatpush.xpose.msra.mxu0 %v420
    %v422 = vand.u32 %v71, 4294901760
    %v423 = vsub.f32 %v71, %v422
    %v424 = vand.u32 %v423, 4294901760
    %425 = vmatpush.xpose.msra.mxu0 %v424
    %v426 = vand.u32 %v68, 4294901760
    %v427 = vsub.f32 %v68, %v426
    %v428 = vand.u32 %v427, 4294901760
    %429 = vmatpush.xpose.msra.mxu0 %v428
    %v430 = vand.u32 %v65, 4294901760
    %v431 = vsub.f32 %v65, %v430
    %v432 = vand.u32 %v431, 4294901760
    %433 = vmatpush.xpose.msra.mxu0 %v432
    %v434 = vand.u32 %v59, 4294901760
    %435 = vmatmul.f32.gmra.mxu0 %v434
    %v436 = vpop.f32.mrf.mxu0
    %v437 = vadd.f32 %v362, %v436
    %v438 = vand.u32 %v62, 4294901760
    %439 = vmatmul.f32.gmra.mxu0 %v438
    %v440 = vpop.f32.mrf.mxu0
    %v441 = vadd.f32 %v368, %v440
    %442 = vdwg.mxu0
    %v443 = vand.u32 %v110, 4294901760
    %444 = vmatpush.xpose.msra.mxu0 %v443
    %v445 = vand.u32 %v107, 4294901760
    %446 = vmatpush.xpose.msra.mxu0 %v445
    %v447 = vand.u32 %v104, 4294901760
    %448 = vmatpush.xpose.msra.mxu0 %v447
    %v449 = vand.u32 %v101, 4294901760
    %450 = vmatpush.xpose.msra.mxu0 %v449
    %v451 = vand.u32 %v98, 4294901760
    %452 = vmatpush.xpose.msra.mxu0 %v451
    %v453 = vand.u32 %v95, 4294901760
    %454 = vmatpush.xpose.msra.mxu0 %v453
    %v455 = vand.u32 %v92, 4294901760
    %456 = vmatpush.xpose.msra.mxu0 %v455
    %v457 = vand.u32 %v89, 4294901760
    %458 = vmatpush.xpose.msra.mxu0 %v457
    %v459 = vand.u32 %v86, 4294901760
    %460 = vmatpush.xpose.msra.mxu0 %v459
    %v461 = vand.u32 %v83, 4294901760
    %462 = vmatpush.xpose.msra.mxu0 %v461
    %v463 = vand.u32 %v80, 4294901760
    %464 = vmatpush.xpose.msra.mxu0 %v463
    %v465 = vand.u32 %v77, 4294901760
    %466 = vmatpush.xpose.msra.mxu0 %v465
    %v467 = vand.u32 %v74, 4294901760
    %468 = vmatpush.xpose.msra.mxu0 %v467
    %v469 = vand.u32 %v71, 4294901760
    %470 = vmatpush.xpose.msra.mxu0 %v469
    %v471 = vand.u32 %v68, 4294901760
    %472 = vmatpush.xpose.msra.mxu0 %v471
    %v473 = vand.u32 %v65, 4294901760
    %474 = vmatpush.xpose.msra.mxu0 %v473
    %v475 = vand.u32 %v59, 4294901760
    %476 = vmatmul.f32.gmra.mxu0 %v475
    %v477 = vpop.f32.mrf.mxu0
    %v478 = vadd.f32 %v437, %v477
    %v479 = vand.u32 %v62, 4294901760
    %480 = vmatmul.f32.gmra.mxu0 %v479
    %v481 = vpop.f32.mrf.mxu0
    %v482 = vadd.f32 %v441, %v481
    %483 = vdwg.mxu0
    %v484 = vmax.f32 %v478, 0.0
    %v485 = vmax.f32 %v482, 0.0
    %v486 = vld [vmem:[%s3] sm:$0xff]
    %v487 = vld [vmem:[%s3 + $0x8] sm:$0xff]
    %v488 = vld [vmem:[%s3 + $0x10] sm:$0xff]
    %v489 = vld [vmem:[%s3 + $0x18] sm:$0xff]
    %v490 = vld [vmem:[%s4] sm:$0xff]
    %v491 = vld [vmem:[%s4 + $0x8] sm:$0xff]
    %v492 = vld [vmem:[%s4 + $0x10] sm:$0xff]
    %v493 = vld [vmem:[%s4 + $0x18] sm:$0xff]
    %495 = vset.pattern.permute.xlu0 0
    %496 = vperm.xlu0 %495, %v490
    %v497 = vpop.permute.xlu0 %496
    %500 = vset.pattern.permute.xlu0 0
    %501 = vperm.xlu0 %500, %v491
    %v502 = vpop.permute.xlu0 %501
    %505 = vset.pattern.permute.xlu0 0
    %506 = vperm.xlu0 %505, %v492
    %v507 = vpop.permute.xlu0 %506
    %510 = vset.pattern.permute.xlu0 0
    %511 = vperm.xlu0 %510, %v493
    %v512 = vpop.permute.xlu0 %511
    %vm514 = vcmask 130048
    %v516 = vsel %vm514, %v486, 0
    %v519 = vsel %vm514, %v487, 0
    %v522 = vsel %vm514, %v488, 0
    %v525 = vsel %vm514, %v489, 0
    %527 = vmatpush.msra.mxu0 0.0
    %528 = vmatpush.msra.mxu0 0.0
    %529 = vmatpush.msra.mxu0 0.0
    %530 = vmatpush.msra.mxu0 0.0
    %531 = vmatpush.msra.mxu0 0.0
    %532 = vmatpush.msra.mxu0 0.0
    %533 = vmatpush.msra.mxu0 0.0
    %534 = vmatpush.msra.mxu0 0.0
    %535 = vmatpush.msra.mxu0 0.0
    %536 = vmatpush.msra.mxu0 0.0
    %537 = vmatpush.msra.mxu0 0.0
    %538 = vmatpush.msra.mxu0 0.0
    %539 = vmatpush.msra.mxu0 0.0
    %540 = vmatpush.msra.mxu0 0.0
    %v541 = vand.u32 %v485, 4294901760
    %542 = vmatpush.msra.mxu0 %v541
    %v543 = vand.u32 %v484, 4294901760
    %544 = vmatpush.msra.mxu0 %v543
    %v545 = vand.u32 %v516, 4294901760
    %v546 = vsub.f32 %v516, %v545
    %v547 = vand.u32 %v546, 4294901760
    %v548 = vsub.f32 %v546, %v547
    %v549 = vand.u32 %v548, 4294901760
    %550 = vmatmul.f32.gmra.mxu0 %v549
    %v551 = vpop.f32.mrf.mxu0
    %v552 = vadd.f32 %v497, %v551
    %v553 = vand.u32 %v519, 4294901760
    %v554 = vsub.f32 %v519, %v553
    %v555 = vand.u32 %v554, 4294901760
    %v556 = vsub.f32 %v554, %v555
    %v557 = vand.u32 %v556, 4294901760
    %558 = vmatmul.f32.gmra.mxu0 %v557
    %v559 = vpop.f32.mrf.mxu0
    %v560 = vadd.f32 %v502, %v559
    %v561 = vand.u32 %v522, 4294901760
    %v562 = vsub.f32 %v522, %v561
    %v563 = vand.u32 %v562, 4294901760
    %v564 = vsub.f32 %v562, %v563
    %v565 = vand.u32 %v564, 4294901760
    %566 = vmatmul.f32.gmra.mxu0 %v565
    %v567 = vpop.f32.mrf.mxu0
    %v568 = vadd.f32 %v507, %v567
    %v569 = vand.u32 %v525, 4294901760
    %v570 = vsub.f32 %v525, %v569
    %v571 = vand.u32 %v570, 4294901760
    %v572 = vsub.f32 %v570, %v571
    %v573 = vand.u32 %v572, 4294901760
    %574 = vmatmul.f32.gmra.mxu0 %v573
    %v575 = vpop.f32.mrf.mxu0
    %v576 = vadd.f32 %v512, %v575
    %577 = vdwg.mxu0
    %578 = vmatpush.msra.mxu0 0.0
    %579 = vmatpush.msra.mxu0 0.0
    %580 = vmatpush.msra.mxu0 0.0
    %581 = vmatpush.msra.mxu0 0.0
    %582 = vmatpush.msra.mxu0 0.0
    %583 = vmatpush.msra.mxu0 0.0
    %584 = vmatpush.msra.mxu0 0.0
    %585 = vmatpush.msra.mxu0 0.0
    %586 = vmatpush.msra.mxu0 0.0
    %587 = vmatpush.msra.mxu0 0.0
    %588 = vmatpush.msra.mxu0 0.0
    %589 = vmatpush.msra.mxu0 0.0
    %590 = vmatpush.msra.mxu0 0.0
    %591 = vmatpush.msra.mxu0 0.0
    %v592 = vand.u32 %v485, 4294901760
    %v593 = vsub.f32 %v485, %v592
    %v594 = vand.u32 %v593, 4294901760
    %v595 = vsub.f32 %v593, %v594
    %v596 = vand.u32 %v595, 4294901760
    %597 = vmatpush.msra.mxu0 %v596
    %v598 = vand.u32 %v484, 4294901760
    %v599 = vsub.f32 %v484, %v598
    %v600 = vand.u32 %v599, 4294901760
    %v601 = vsub.f32 %v599, %v600
    %v602 = vand.u32 %v601, 4294901760
    %603 = vmatpush.msra.mxu0 %v602
    %v604 = vand.u32 %v516, 4294901760
    %605 = vmatmul.f32.gmra.mxu0 %v604
    %v606 = vpop.f32.mrf.mxu0
    %v607 = vadd.f32 %v552, %v606
    %v608 = vand.u32 %v519, 4294901760
    %609 = vmatmul.f32.gmra.mxu0 %v608
    %v610 = vpop.f32.mrf.mxu0
    %v611 = vadd.f32 %v560, %v610
    %v612 = vand.u32 %v522, 4294901760
    %613 = vmatmul.f32.gmra.mxu0 %v612
    %v614 = vpop.f32.mrf.mxu0
    %v615 = vadd.f32 %v568, %v614
    %v616 = vand.u32 %v525, 4294901760
    %617 = vmatmul.f32.gmra.mxu0 %v616
    %v618 = vpop.f32.mrf.mxu0
    %v619 = vadd.f32 %v576, %v618
    %620 = vdwg.mxu0
    %621 = vmatpush.msra.mxu0 0.0
    %622 = vmatpush.msra.mxu0 0.0
    %623 = vmatpush.msra.mxu0 0.0
    %624 = vmatpush.msra.mxu0 0.0
    %625 = vmatpush.msra.mxu0 0.0
    %626 = vmatpush.msra.mxu0 0.0
    %627 = vmatpush.msra.mxu0 0.0
    %628 = vmatpush.msra.mxu0 0.0
    %629 = vmatpush.msra.mxu0 0.0
    %630 = vmatpush.msra.mxu0 0.0
    %631 = vmatpush.msra.mxu0 0.0
    %632 = vmatpush.msra.mxu0 0.0
    %633 = vmatpush.msra.mxu0 0.0
    %634 = vmatpush.msra.mxu0 0.0
    %v635 = vand.u32 %v485, 4294901760
    %v636 = vsub.f32 %v485, %v635
    %637 = vmatpush.msra.mxu0 %v636
    %v638 = vand.u32 %v484, 4294901760
    %v639 = vsub.f32 %v484, %v638
    %640 = vmatpush.msra.mxu0 %v639
    %v641 = vand.u32 %v516, 4294901760
    %v642 = vsub.f32 %v516, %v641
    %643 = vmatmul.f32.gmra.mxu0 %v642
    %v644 = vpop.f32.mrf.mxu0
    %v645 = vadd.f32 %v607, %v644
    %v646 = vand.u32 %v519, 4294901760
    %v647 = vsub.f32 %v519, %v646
    %648 = vmatmul.f32.gmra.mxu0 %v647
    %v649 = vpop.f32.mrf.mxu0
    %v650 = vadd.f32 %v611, %v649
    %v651 = vand.u32 %v522, 4294901760
    %v652 = vsub.f32 %v522, %v651
    %653 = vmatmul.f32.gmra.mxu0 %v652
    %v654 = vpop.f32.mrf.mxu0
    %v655 = vadd.f32 %v615, %v654
    %v656 = vand.u32 %v525, 4294901760
    %v657 = vsub.f32 %v525, %v656
    %658 = vmatmul.f32.gmra.mxu0 %v657
    %v659 = vpop.f32.mrf.mxu0
    %v660 = vadd.f32 %v619, %v659
    %661 = vdwg.mxu0
    %662 = vmatpush.msra.mxu0 0.0
    %663 = vmatpush.msra.mxu0 0.0
    %664 = vmatpush.msra.mxu0 0.0
    %665 = vmatpush.msra.mxu0 0.0
    %666 = vmatpush.msra.mxu0 0.0
    %667 = vmatpush.msra.mxu0 0.0
    %668 = vmatpush.msra.mxu0 0.0
    %669 = vmatpush.msra.mxu0 0.0
    %670 = vmatpush.msra.mxu0 0.0
    %671 = vmatpush.msra.mxu0 0.0
    %672 = vmatpush.msra.mxu0 0.0
    %673 = vmatpush.msra.mxu0 0.0
    %674 = vmatpush.msra.mxu0 0.0
    %675 = vmatpush.msra.mxu0 0.0
    %v676 = vand.u32 %v485, 4294901760
    %677 = vmatpush.msra.mxu0 %v676
    %v678 = vand.u32 %v484, 4294901760
    %679 = vmatpush.msra.mxu0 %v678
    %v680 = vand.u32 %v516, 4294901760
    %v681 = vsub.f32 %v516, %v680
    %v682 = vand.u32 %v681, 4294901760
    %683 = vmatmul.f32.gmra.mxu0 %v682
    %v684 = vpop.f32.mrf.mxu0
    %v685 = vadd.f32 %v645, %v684
    %v686 = vand.u32 %v519, 4294901760
    %v687 = vsub.f32 %v519, %v686
    %v688 = vand.u32 %v687, 4294901760
    %689 = vmatmul.f32.gmra.mxu0 %v688
    %v690 = vpop.f32.mrf.mxu0
    %v691 = vadd.f32 %v650, %v690
    %v692 = vand.u32 %v522, 4294901760
    %v693 = vsub.f32 %v522, %v692
    %v694 = vand.u32 %v693, 4294901760
    %695 = vmatmul.f32.gmra.mxu0 %v694
    %v696 = vpop.f32.mrf.mxu0
    %v697 = vadd.f32 %v655, %v696
    %v698 = vand.u32 %v525, 4294901760
    %v699 = vsub.f32 %v525, %v698
    %v700 = vand.u32 %v699, 4294901760
    %701 = vmatmul.f32.gmra.mxu0 %v700
    %v702 = vpop.f32.mrf.mxu0
    %v703 = vadd.f32 %v660, %v702
    %704 = vdwg.mxu0
    %705 = vmatpush.msra.mxu0 0.0
    %706 = vmatpush.msra.mxu0 0.0
    %707 = vmatpush.msra.mxu0 0.0
    %708 = vmatpush.msra.mxu0 0.0
    %709 = vmatpush.msra.mxu0 0.0
    %710 = vmatpush.msra.mxu0 0.0
    %711 = vmatpush.msra.mxu0 0.0
    %712 = vmatpush.msra.mxu0 0.0
    %713 = vmatpush.msra.mxu0 0.0
    %714 = vmatpush.msra.mxu0 0.0
    %715 = vmatpush.msra.mxu0 0.0
    %716 = vmatpush.msra.mxu0 0.0
    %717 = vmatpush.msra.mxu0 0.0
    %718 = vmatpush.msra.mxu0 0.0
    %v719 = vand.u32 %v485, 4294901760
    %v720 = vsub.f32 %v485, %v719
    %v721 = vand.u32 %v720, 4294901760
    %722 = vmatpush.msra.mxu0 %v721
    %v723 = vand.u32 %v484, 4294901760
    %v724 = vsub.f32 %v484, %v723
    %v725 = vand.u32 %v724, 4294901760
    %726 = vmatpush.msra.mxu0 %v725
    %v727 = vand.u32 %v516, 4294901760
    %728 = vmatmul.f32.gmra.mxu0 %v727
    %v729 = vpop.f32.mrf.mxu0
    %v730 = vadd.f32 %v685, %v729
    %v731 = vand.u32 %v519, 4294901760
    %732 = vmatmul.f32.gmra.mxu0 %v731
    %v733 = vpop.f32.mrf.mxu0
    %v734 = vadd.f32 %v691, %v733
    %v735 = vand.u32 %v522, 4294901760
    %736 = vmatmul.f32.gmra.mxu0 %v735
    %v737 = vpop.f32.mrf.mxu0
    %v738 = vadd.f32 %v697, %v737
    %v739 = vand.u32 %v525, 4294901760
    %740 = vmatmul.f32.gmra.mxu0 %v739
    %v741 = vpop.f32.mrf.mxu0
    %v742 = vadd.f32 %v703, %v741
    %743 = vdwg.mxu0
    %744 = vmatpush.msra.mxu0 0.0
    %745 = vmatpush.msra.mxu0 0.0
    %746 = vmatpush.msra.mxu0 0.0
    %747 = vmatpush.msra.mxu0 0.0
    %748 = vmatpush.msra.mxu0 0.0
    %749 = vmatpush.msra.mxu0 0.0
    %750 = vmatpush.msra.mxu0 0.0
    %751 = vmatpush.msra.mxu0 0.0
    %752 = vmatpush.msra.mxu0 0.0
    %753 = vmatpush.msra.mxu0 0.0
    %754 = vmatpush.msra.mxu0 0.0
    %755 = vmatpush.msra.mxu0 0.0
    %756 = vmatpush.msra.mxu0 0.0
    %757 = vmatpush.msra.mxu0 0.0
    %v758 = vand.u32 %v485, 4294901760
    %759 = vmatpush.msra.mxu0 %v758
    %v760 = vand.u32 %v484, 4294901760
    %761 = vmatpush.msra.mxu0 %v760
    %v762 = vand.u32 %v516, 4294901760
    %763 = vmatmul.f32.gmra.mxu0 %v762
    %v764 = vpop.f32.mrf.mxu0
    %v765 = vadd.f32 %v730, %v764
    %v766 = vand.u32 %v519, 4294901760
    %767 = vmatmul.f32.gmra.mxu0 %v766
    %v768 = vpop.f32.mrf.mxu0
    %v769 = vadd.f32 %v734, %v768
    %v770 = vand.u32 %v522, 4294901760
    %771 = vmatmul.f32.gmra.mxu0 %v770
    %v772 = vpop.f32.mrf.mxu0
    %v773 = vadd.f32 %v738, %v772
    %v774 = vand.u32 %v525, 4294901760
    %775 = vmatmul.f32.gmra.mxu0 %v774
    %v776 = vpop.f32.mrf.mxu0
    %v777 = vadd.f32 %v742, %v776
    %778 = vdwg.mxu0
    %v779 = vmax.f32 %v765, 0.0
    %v780 = vmax.f32 %v769, 0.0
    %v781 = vmax.f32 %v773, 0.0
    %v782 = vmax.f32 %v777, 0.0
    %v783 = vld [vmem:[%s5] sm:$0x7]
    %v784 = vld [vmem:[%s6] sm:$0x7]
    %786 = vset.pattern.permute.xlu0 0
    %787 = vperm.xlu0 %786, %v784
    %v788 = vpop.permute.xlu0 %787
    %vm790 = vcmask 261120
    %v792 = vsel %vm790, %v783, 0
    %794 = vmatpush.msra.mxu0 0.0
    %795 = vmatpush.msra.mxu0 0.0
    %796 = vmatpush.msra.mxu0 0.0
    %797 = vmatpush.msra.mxu0 0.0
    %798 = vmatpush.msra.mxu0 0.0
    %799 = vmatpush.msra.mxu0 0.0
    %800 = vmatpush.msra.mxu0 0.0
    %801 = vmatpush.msra.mxu0 0.0
    %802 = vmatpush.msra.mxu0 0.0
    %803 = vmatpush.msra.mxu0 0.0
    %804 = vmatpush.msra.mxu0 0.0
    %805 = vmatpush.msra.mxu0 0.0
    %v806 = vand.u32 %v782, 4294901760
    %807 = vmatpush.msra.mxu0 %v806
    %v808 = vand.u32 %v781, 4294901760
    %809 = vmatpush.msra.mxu0 %v808
    %v810 = vand.u32 %v780, 4294901760
    %811 = vmatpush.msra.mxu0 %v810
    %v812 = vand.u32 %v779, 4294901760
    %813 = vmatpush.msra.mxu0 %v812
    %v814 = vand.u32 %v792, 4294901760
    %v815 = vsub.f32 %v792, %v814
    %v816 = vand.u32 %v815, 4294901760
    %v817 = vsub.f32 %v815, %v816
    %v818 = vand.u32 %v817, 4294901760
    %819 = vmatmul.f32.gmra.mxu0 %v818
    %v820 = vpop.f32.mrf.mxu0
    %v821 = vadd.f32 %v788, %v820
    %822 = vdwg.mxu0
    %823 = vmatpush.msra.mxu0 0.0
    %824 = vmatpush.msra.mxu0 0.0
    %825 = vmatpush.msra.mxu0 0.0
    %826 = vmatpush.msra.mxu0 0.0
    %827 = vmatpush.msra.mxu0 0.0
    %828 = vmatpush.msra.mxu0 0.0
    %829 = vmatpush.msra.mxu0 0.0
    %830 = vmatpush.msra.mxu0 0.0
    %831 = vmatpush.msra.mxu0 0.0
    %832 = vmatpush.msra.mxu0 0.0
    %833 = vmatpush.msra.mxu0 0.0
    %834 = vmatpush.msra.mxu0 0.0
    %v835 = vand.u32 %v782, 4294901760
    %v836 = vsub.f32 %v782, %v835
    %v837 = vand.u32 %v836, 4294901760
    %v838 = vsub.f32 %v836, %v837
    %v839 = vand.u32 %v838, 4294901760
    %840 = vmatpush.msra.mxu0 %v839
    %v841 = vand.u32 %v781, 4294901760
    %v842 = vsub.f32 %v781, %v841
    %v843 = vand.u32 %v842, 4294901760
    %v844 = vsub.f32 %v842, %v843
    %v845 = vand.u32 %v844, 4294901760
    %846 = vmatpush.msra.mxu0 %v845
    %v847 = vand.u32 %v780, 4294901760
    %v848 = vsub.f32 %v780, %v847
    %v849 = vand.u32 %v848, 4294901760
    %v850 = vsub.f32 %v848, %v849
    %v851 = vand.u32 %v850, 4294901760
    %852 = vmatpush.msra.mxu0 %v851
    %v853 = vand.u32 %v779, 4294901760
    %v854 = vsub.f32 %v779, %v853
    %v855 = vand.u32 %v854, 4294901760
    %v856 = vsub.f32 %v854, %v855
    %v857 = vand.u32 %v856, 4294901760
    %858 = vmatpush.msra.mxu0 %v857
    %v859 = vand.u32 %v792, 4294901760
    %860 = vmatmul.f32.gmra.mxu0 %v859
    %v861 = vpop.f32.mrf.mxu0
    %v862 = vadd.f32 %v821, %v861
    %863 = vdwg.mxu0
    %864 = vmatpush.msra.mxu0 0.0
    %865 = vmatpush.msra.mxu0 0.0
    %866 = vmatpush.msra.mxu0 0.0
    %867 = vmatpush.msra.mxu0 0.0
    %868 = vmatpush.msra.mxu0 0.0
    %869 = vmatpush.msra.mxu0 0.0
    %870 = vmatpush.msra.mxu0 0.0
    %871 = vmatpush.msra.mxu0 0.0
    %872 = vmatpush.msra.mxu0 0.0
    %873 = vmatpush.msra.mxu0 0.0
    %874 = vmatpush.msra.mxu0 0.0
    %875 = vmatpush.msra.mxu0 0.0
    %v876 = vand.u32 %v782, 4294901760
    %v877 = vsub.f32 %v782, %v876
    %878 = vmatpush.msra.mxu0 %v877
    %v879 = vand.u32 %v781, 4294901760
    %v880 = vsub.f32 %v781, %v879
    %881 = vmatpush.msra.mxu0 %v880
    %v882 = vand.u32 %v780, 4294901760
    %v883 = vsub.f32 %v780, %v882
    %884 = vmatpush.msra.mxu0 %v883
    %v885 = vand.u32 %v779, 4294901760
    %v886 = vsub.f32 %v779, %v885
    %887 = vmatpush.msra.mxu0 %v886
    %v888 = vand.u32 %v792, 4294901760
    %v889 = vsub.f32 %v792, %v888
    %890 = vmatmul.f32.gmra.mxu0 %v889
    %v891 = vpop.f32.mrf.mxu0
    %v892 = vadd.f32 %v862, %v891
    %893 = vdwg.mxu0
    %894 = vmatpush.msra.mxu0 0.0
    %895 = vmatpush.msra.mxu0 0.0
    %896 = vmatpush.msra.mxu0 0.0
    %897 = vmatpush.msra.mxu0 0.0
    %898 = vmatpush.msra.mxu0 0.0
    %899 = vmatpush.msra.mxu0 0.0
    %900 = vmatpush.msra.mxu0 0.0
    %901 = vmatpush.msra.mxu0 0.0
    %902 = vmatpush.msra.mxu0 0.0
    %903 = vmatpush.msra.mxu0 0.0
    %904 = vmatpush.msra.mxu0 0.0
    %905 = vmatpush.msra.mxu0 0.0
    %v906 = vand.u32 %v782, 4294901760
    %907 = vmatpush.msra.mxu0 %v906
    %v908 = vand.u32 %v781, 4294901760
    %909 = vmatpush.msra.mxu0 %v908
    %v910 = vand.u32 %v780, 4294901760
    %911 = vmatpush.msra.mxu0 %v910
    %v912 = vand.u32 %v779, 4294901760
    %913 = vmatpush.msra.mxu0 %v912
    %v914 = vand.u32 %v792, 4294901760
    %v915 = vsub.f32 %v792, %v914
    %v916 = vand.u32 %v915, 4294901760
    %917 = vmatmul.f32.gmra.mxu0 %v916
    %v918 = vpop.f32.mrf.mxu0
    %v919 = vadd.f32 %v892, %v918
    %920 = vdwg.mxu0
    %921 = vmatpush.msra.mxu0 0.0
    %922 = vmatpush.msra.mxu0 0.0
    %923 = vmatpush.msra.mxu0 0.0
    %924 = vmatpush.msra.mxu0 0.0
    %925 = vmatpush.msra.mxu0 0.0
    %926 = vmatpush.msra.mxu0 0.0
    %927 = vmatpush.msra.mxu0 0.0
    %928 = vmatpush.msra.mxu0 0.0
    %929 = vmatpush.msra.mxu0 0.0
    %930 = vmatpush.msra.mxu0 0.0
    %931 = vmatpush.msra.mxu0 0.0
    %932 = vmatpush.msra.mxu0 0.0
    %v933 = vand.u32 %v782, 4294901760
    %v934 = vsub.f32 %v782, %v933
    %v935 = vand.u32 %v934, 4294901760
    %936 = vmatpush.msra.mxu0 %v935
    %v937 = vand.u32 %v781, 4294901760
    %v938 = vsub.f32 %v781, %v937
    %v939 = vand.u32 %v938, 4294901760
    %940 = vmatpush.msra.mxu0 %v939
    %v941 = vand.u32 %v780, 4294901760
    %v942 = vsub.f32 %v780, %v941
    %v943 = vand.u32 %v942, 4294901760
    %944 = vmatpush.msra.mxu0 %v943
    %v945 = vand.u32 %v779, 4294901760
    %v946 = vsub.f32 %v779, %v945
    %v947 = vand.u32 %v946, 4294901760
    %948 = vmatpush.msra.mxu0 %v947
    %v949 = vand.u32 %v792, 4294901760
    %950 = vmatmul.f32.gmra.mxu0 %v949
    %v951 = vpop.f32.mrf.mxu0
    %v952 = vadd.f32 %v919, %v951
    %953 = vdwg.mxu0
    %954 = vmatpush.msra.mxu0 0.0
    %955 = vmatpush.msra.mxu0 0.0
    %956 = vmatpush.msra.mxu0 0.0
    %957 = vmatpush.msra.mxu0 0.0
    %958 = vmatpush.msra.mxu0 0.0
    %959 = vmatpush.msra.mxu0 0.0
    %960 = vmatpush.msra.mxu0 0.0
    %961 = vmatpush.msra.mxu0 0.0
    %962 = vmatpush.msra.mxu0 0.0
    %963 = vmatpush.msra.mxu0 0.0
    %964 = vmatpush.msra.mxu0 0.0
    %965 = vmatpush.msra.mxu0 0.0
    %v966 = vand.u32 %v782, 4294901760
    %967 = vmatpush.msra.mxu0 %v966
    %v968 = vand.u32 %v781, 4294901760
    %969 = vmatpush.msra.mxu0 %v968
    %v970 = vand.u32 %v780, 4294901760
    %971 = vmatpush.msra.mxu0 %v970
    %v972 = vand.u32 %v779, 4294901760
    %973 = vmatpush.msra.mxu0 %v972
    %v974 = vand.u32 %v792, 4294901760
    %975 = vmatmul.f32.gmra.mxu0 %v974
    %v976 = vpop.f32.mrf.mxu0
    %v977 = vadd.f32 %v952, %v976
    %978 = vdwg.mxu0
    %979 = vst [vmem:[#allocation2] sm:$0x7] %v977
    // Predicated region
    $region30: #{tpu_custom_call.1} parent=1 // pred_check
      _
    $region31: #{tpu_custom_call.1} parent=1 // pred_check_branch
      %981 = sbr.rel (0) target = $region33
    $region32: #{tpu_custom_call.1} parent=1 // pred_region
      %983 = vsyncadd [#allocation3], 0
      %s985 = sshll.u32 [#allocation2], 4
      %s986 = int_to_ptr.vmem [resolvable:$true] %s985
      %s987 = sshll.u32 %s7, 4
      %s988 = int_to_ptr.hbm [resolvable:$true] %s987
      %990 = dma.vmem_to_hbm [thread:$0]  %s986, 64, %s988, [#allocation3]
    $region33: #{tpu_custom_call.1} parent=1 // pred_fallthru
      _
    // Predicated region
    $region34: #{tpu_custom_call.1} parent=1 // pred_check
      _
    $region35: #{tpu_custom_call.1} parent=1 // pred_check_branch
      %992 = sbr.rel (0) target = $region37
    $region36: #{tpu_custom_call.1} parent=1 // pred_region
      %994 = dma.done [#allocation3], 64
    $region37: #{tpu_custom_call.1} parent=1 // pred_fallthru
      _
    %995 = vsyncpa [#allocation3], 1

</llo_original>
